<compile_context>
chip_gen: v6e
topology: v6e:2x2x1
jax: 0.10.0
libtpu: 0.0.40
codegen_flags: <defaults>
</compile_context>

<pallas_src>
import functools

import jax
import jax.numpy as jnp
import numpy as np
from jax import lax
from jax.experimental import pallas as pl
from jax.experimental.pallas import tpu as pltpu


# ----------------------------- adjacency preprocessing (glue, plain numpy) ---
def sym_norm_adj(W: np.ndarray) -> np.ndarray:
    assert W.shape[0] == W.shape[1]
    N = W.shape[0]
    W = W + 0.5 * np.identity(N)
    D = np.diag(1.0 / np.sum(W, axis=1))
    A = np.sqrt(D) @ W @ np.sqrt(D)
    return A


def softmax_np(x: np.ndarray, axis: int) -> np.ndarray:
    x = x - x.max(axis=axis, keepdims=True)
    e = np.exp(x)
    return e / e.sum(axis=axis, keepdims=True)


# ----------------------------- Pallas kernel ---------------------------------
def _embgcn_sa_kernel(x_ref, wqkv_ref, bqkv_ref, adj_ref, o_ref, *,
                      n_nodes, c_out, batches_per_step):
    # x_ref    : (batches_per_step * N, C_in)       -- batch folded into rows
    # wqkv_ref : (C_in, 3*C_out)  bqkv_ref: (1, 3*C_out)  adj_ref: (N, N)
    # o_ref    : (batches_per_step, N, C_out)
    x = x_ref[...]

    # Single fused QKV projection for every batch handled by this grid step.
    qkv = jnp.dot(x, wqkv_ref[...],
                  preferred_element_type=jnp.float32) + bqkv_ref[...]
    q = qkv[:, :c_out]
    k = qkv[:, c_out:2 * c_out]
    v = qkv[:, 2 * c_out:]
    adj = adj_ref[...]

    # Attention is inherently per-batch; batches_per_step is 1 or 2 -> unroll.
    for j in range(batches_per_step):
        lo = j * n_nodes
        q_j = q[lo:lo + n_nodes]
        k_j = k[lo:lo + n_nodes]
        v_j = v[lo:lo + n_nodes]

        # Q @ K^T as a contraction over the channel axis (no explicit transpose).
        s = lax.dot_general(q_j, k_j, (((1,), (1,)), ((), ())),
                            preferred_element_type=jnp.float32)

        # softmax over dim=1 of the (B, N, M) score == axis 0 of the (N, M) tile
        s = s - jnp.max(s, axis=0, keepdims=True)
        e = jnp.exp(s)
        inv = pl.reciprocal(jnp.sum(e, axis=0, keepdims=True))  # exact 1/x
        p = e * inv

        # score @ adj  ('bnm,mc->bnc'), then score @ V ('bnm,bmc->bnc')
        p = jnp.dot(p, adj, preferred_element_type=jnp.float32)
        out = jnp.dot(p, v_j, preferred_element_type=jnp.float32)

        # final ReLU from EmbGCN_SA.forward
        o_ref[j] = jnp.maximum(out, 0.0)


def _num_grid_chunks(batch: int) -> int:
    """1 grid step on single-TC chips (v5e/v6e); 2 parallel steps on v7x."""
    try:
        kind = jax.devices()[0].device_kind.lower()
    except Exception:
        return 1
    if batch % 2 == 0 and ("v7" in kind or "7x" in kind):
        return 2
    return 1


@jax.jit
def embgcn_sa_forward(x, wq, bq, wk, bk, wv, adj):
    B, N, C_in = x.shape
    C_out = wq.shape[1]

    # Fuse the three projections: [Wq | Wk | Wv], bias [bq | bk | 0] (Wv: no bias).
    w_qkv = jnp.concatenate([wq, wk, wv], axis=1)                  # (C_in, 3*C_out)
    b_qkv = jnp.concatenate([bq, bk, jnp.zeros_like(bq)], axis=1)  # (1, 3*C_out)

    num_chunks = _num_grid_chunks(B)     # static (trace-time) decision
    bs = B // num_chunks
    x_flat = x.reshape(num_chunks, bs * N, C_in)

    kernel = functools.partial(_embgcn_sa_kernel, n_nodes=N, c_out=C_out,
                               batches_per_step=bs)

    flops = 2 * B * N * (3 * C_in * C_out + 2 * N * C_out + N * N)
    bytes_accessed = 4 * (B * N * C_in + 3 * C_in * C_out + 3 * C_out
                          + N * N + B * N * C_out)

    grid_spec = pltpu.PrefetchScalarGridSpec(
        num_scalar_prefetch=0,
        grid=(num_chunks,),
        in_specs=[
            pl.BlockSpec((None, bs * N, C_in), lambda i: (i, 0, 0)),   # x
            pl.BlockSpec((C_in, 3 * C_out), lambda i: (0, 0)),         # W_qkv
            pl.BlockSpec((1, 3 * C_out), lambda i: (0, 0)),            # b_qkv
            pl.BlockSpec((N, N), lambda i: (0, 0)),                    # adj
        ],
        out_specs=pl.BlockSpec((None, bs, N, C_out), lambda i: (i, 0, 0, 0)),
    )

    out = pl.pallas_call(
        kernel,
        out_shape=jax.ShapeDtypeStruct((num_chunks, bs, N, C_out), jnp.float32),
        grid_spec=grid_spec,
        compiler_params=pltpu.CompilerParams(
            dimension_semantics=("parallel",)),
        cost_estimate=pl.CostEstimate(flops=flops,
                                      transcendentals=B * N * N,
                                      bytes_accessed=bytes_accessed),
    )(x_flat, w_qkv, b_qkv, adj)
    return out.reshape(B, N, C_out)


# ----------------------------- pure-JAX reference (for verification) ---------
def embgcn_sa_ref(x, wq, bq, wk, bk, wv, adj):
    q = x @ wq + bq
    k = x @ wk + bk
    v = x @ wv
    s = jnp.einsum('bnc,bmc->bnm', q, k)
    s = jax.nn.softmax(s, axis=1)
    s = jnp.einsum('bnm,mc->bnc', s, adj)
    s = jnp.einsum('bnm,bmc->bnc', s, v)
    return jax.nn.relu(s)


# ----------------------------- main -------------------------------------------
if __name__ == "__main__":
    # Small shapes consistent with the module: batch=2, N=16 nodes,
    # dim_in=4, dim_out=32. cheb_k / embed_dim / node_embeddings are unused
    # by the forward pass, exactly as in the PyTorch code.
    B, N, C_in, C_out = 2, 16, 4, 32

    key = jax.random.PRNGKey(0)
    k_x, k_adj, k_wq, k_bq, k_wk, k_bk, k_wv, k_emb = jax.random.split(key, 8)

    # Deterministic synthetic adjacency (non-negative so row sums are valid).
    adj_raw = np.asarray(
        jax.random.uniform(k_adj, (N, N), dtype=jnp.float32, minval=0.0,
                           maxval=1.0))
    adj_np = sym_norm_adj(adj_raw.astype(np.float64))
    # F.softmax(sym_norm_Adj_matrix) with no dim on a 2-D tensor -> dim=1 (rows).
    adj_np = softmax_np(adj_np, axis=1).astype(np.float32)
    adj = jnp.asarray(adj_np)

    # Deterministic parameter init (nn.Linear-style scale).
    scale = 1.0 / np.sqrt(C_in)
    wq = jax.random.uniform(k_wq, (C_in, C_out), jnp.float32, -scale, scale)
    bq = jax.random.uniform(k_bq, (1, C_out), jnp.float32, -scale, scale)
    wk = jax.random.uniform(k_wk, (C_in, C_out), jnp.float32, -scale, scale)
    bk = jax.random.uniform(k_bk, (1, C_out), jnp.float32, -scale, scale)
    wv = jax.random.uniform(k_wv, (C_in, C_out), jnp.float32, -scale, scale)

    x = jax.random.normal(k_x, (B, N, C_in), jnp.float32)
    node_embeddings = jax.random.normal(k_emb, (N, 8), jnp.float32)  # unused

    out = embgcn_sa_forward(x, wq, bq, wk, bk, wv, adj)
    out = jax.block_until_ready(out)

    ref = embgcn_sa_ref(x, wq, bq, wk, bk, wv, adj)
    np.testing.assert_allclose(np.asarray(out), np.asarray(ref),
                               rtol=1e-5, atol=1e-5)

    print("KERNEL_OK")
</pallas_src>

<mosaic_0001>
module attributes {stable_mosaic.version = 11 : i64} {
  func.func @_embgcn_sa_kernel(%arg0: i32, %arg1: memref<1x32x4xf32, #tpu.memory_space<vmem>>, %arg2: memref<4x96xf32, #tpu.memory_space<vmem>>, %arg3: memref<1x96xf32, #tpu.memory_space<vmem>>, %arg4: memref<16x16xf32, #tpu.memory_space<vmem>>, %arg5: memref<1x2x16x32xf32, #tpu.memory_space<vmem>>) attributes {dimension_semantics = [#tpu.dimension_semantics<parallel>], iteration_bounds = array<i64: 1>, scalar_prefetch = 0 : i64, scratch_operands = 0 : i64, tpu.core_type = #tpu.core_type<tc>, window_params = [{transform_indices = @transform_0, window_bounds = array<i64: 1, 32, 4>}, {pipeline_mode = #tpu.pipeline_mode<synchronous>, transform_indices = @transform_1, window_bounds = array<i64: 4, 96>}, {pipeline_mode = #tpu.pipeline_mode<synchronous>, transform_indices = @transform_2, window_bounds = array<i64: 1, 96>}, {pipeline_mode = #tpu.pipeline_mode<synchronous>, transform_indices = @transform_3, window_bounds = array<i64: 16, 16>}, {transform_indices = @transform_4, window_bounds = array<i64: 1, 2, 16, 32>}]} {
    %c0 = arith.constant 0 : index
    %c0_0 = arith.constant 0 : index
    %c0_1 = arith.constant 0 : index
    %0 = vector.load %arg1[%c0, %c0_0, %c0_1] : memref<1x32x4xf32, #tpu.memory_space<vmem>>, vector<1x32x4xf32>
    %1 = vector.shape_cast %0 : vector<1x32x4xf32> to vector<32x4xf32>
    %c0_2 = arith.constant 0 : index
    %c0_3 = arith.constant 0 : index
    %2 = vector.load %arg2[%c0_2, %c0_3] : memref<4x96xf32, #tpu.memory_space<vmem>>, vector<4x96xf32>
    %cst = arith.constant dense<0.000000e+00> : vector<32x96xf32>
    %3 = tpu.matmul %1, %2, %cst {dimension_numbers = #tpu.dot_dimension_numbers<[1], [0], [0], [1], [0, 0, 1, 1], [], []>} : vector<32x4xf32>, vector<4x96xf32>, vector<32x96xf32> -> vector<32x96xf32>
    %c0_4 = arith.constant 0 : index
    %c0_5 = arith.constant 0 : index
    %4 = vector.load %arg3[%c0_4, %c0_5] : memref<1x96xf32, #tpu.memory_space<vmem>>, vector<1x96xf32>
    %5 = vector.broadcast %4 : vector<1x96xf32> to vector<32x96xf32>
    %6 = arith.addf %3, %5 : vector<32x96xf32>
    %7 = vector.extract_strided_slice %6 {offsets = [0, 0], sizes = [32, 32], strides = [1, 1]} : vector<32x96xf32> to vector<32x32xf32>
    %8 = vector.extract_strided_slice %6 {offsets = [0, 32], sizes = [32, 32], strides = [1, 1]} : vector<32x96xf32> to vector<32x32xf32>
    %9 = vector.extract_strided_slice %6 {offsets = [0, 64], sizes = [32, 32], strides = [1, 1]} : vector<32x96xf32> to vector<32x32xf32>
    %c0_6 = arith.constant 0 : index
    %c0_7 = arith.constant 0 : index
    %10 = vector.load %arg4[%c0_6, %c0_7] : memref<16x16xf32, #tpu.memory_space<vmem>>, vector<16x16xf32>
    %11 = vector.extract_strided_slice %7 {offsets = [0, 0], sizes = [16, 32], strides = [1, 1]} : vector<32x32xf32> to vector<16x32xf32>
    %12 = vector.extract_strided_slice %8 {offsets = [0, 0], sizes = [16, 32], strides = [1, 1]} : vector<32x32xf32> to vector<16x32xf32>
    %13 = vector.extract_strided_slice %9 {offsets = [0, 0], sizes = [16, 32], strides = [1, 1]} : vector<32x32xf32> to vector<16x32xf32>
    %cst_8 = arith.constant dense<0.000000e+00> : vector<16x16xf32>
    %14 = tpu.matmul %11, %12, %cst_8 {dimension_numbers = #tpu.dot_dimension_numbers<[1], [1], [0], [0], [0, 0, 1, 0], [], []>} : vector<16x32xf32>, vector<16x32xf32>, vector<16x16xf32> -> vector<16x16xf32>
    %cst_9 = arith.constant dense<0xFF800000> : vector<16xf32>
    %15 = vector.multi_reduction <maximumf>, %14, %cst_9 [0] : vector<16x16xf32> to vector<16xf32>
    %16 = vector.shape_cast %15 : vector<16xf32> to vector<1x16xf32>
    %17 = vector.broadcast %16 : vector<1x16xf32> to vector<16x16xf32>
    %18 = arith.subf %14, %17 : vector<16x16xf32>
    %19 = math.exp %18 : vector<16x16xf32>
    %cst_10 = arith.constant dense<0.000000e+00> : vector<16xf32>
    %20 = vector.multi_reduction <add>, %19, %cst_10 [0] : vector<16x16xf32> to vector<16xf32>
    %21 = vector.shape_cast %20 : vector<16xf32> to vector<1x16xf32>
    %22 = tpu.reciprocal %21 : vector<1x16xf32> -> vector<1x16xf32>
    %23 = vector.broadcast %22 : vector<1x16xf32> to vector<16x16xf32>
    %24 = arith.mulf %19, %23 : vector<16x16xf32>
    %cst_11 = arith.constant dense<0.000000e+00> : vector<16x16xf32>
    %25 = tpu.matmul %24, %10, %cst_11 {dimension_numbers = #tpu.dot_dimension_numbers<[1], [0], [0], [1], [0, 0, 1, 1], [], []>} : vector<16x16xf32>, vector<16x16xf32>, vector<16x16xf32> -> vector<16x16xf32>
    %cst_12 = arith.constant dense<0.000000e+00> : vector<16x32xf32>
    %26 = tpu.matmul %25, %13, %cst_12 {dimension_numbers = #tpu.dot_dimension_numbers<[1], [0], [0], [1], [0, 0, 1, 1], [], []>} : vector<16x16xf32>, vector<16x32xf32>, vector<16x32xf32> -> vector<16x32xf32>
    %cst_13 = arith.constant 0.000000e+00 : f32
    %27 = vector.broadcast %cst_13 : f32 to vector<16x32xf32>
    %28 = arith.maximumf %26, %27 : vector<16x32xf32>
    %c0_14 = arith.constant 0 : index
    %c0_15 = arith.constant 0 : index
    %c0_16 = arith.constant 0 : index
    %c0_17 = arith.constant 0 : index
    %29 = vector.load %arg5[%c0_14, %c0_15, %c0_16, %c0_17] : memref<1x2x16x32xf32, #tpu.memory_space<vmem>>, vector<1x1x16x32xf32>
    %30 = vector.shape_cast %29 : vector<1x1x16x32xf32> to vector<16x32xf32>
    %31 = vector.shape_cast %28 : vector<16x32xf32> to vector<1x1x16x32xf32>
    tpu.vector_store %arg5[%c0_14, %c0_15, %c0_16, %c0_17], %31 {strides = array<i32>} : memref<1x2x16x32xf32, #tpu.memory_space<vmem>>, vector<1x1x16x32xf32>,
    %32 = vector.extract_strided_slice %7 {offsets = [16, 0], sizes = [16, 32], strides = [1, 1]} : vector<32x32xf32> to vector<16x32xf32>
    %33 = vector.extract_strided_slice %8 {offsets = [16, 0], sizes = [16, 32], strides = [1, 1]} : vector<32x32xf32> to vector<16x32xf32>
    %34 = vector.extract_strided_slice %9 {offsets = [16, 0], sizes = [16, 32], strides = [1, 1]} : vector<32x32xf32> to vector<16x32xf32>
    %cst_18 = arith.constant dense<0.000000e+00> : vector<16x16xf32>
    %35 = tpu.matmul %32, %33, %cst_18 {dimension_numbers = #tpu.dot_dimension_numbers<[1], [1], [0], [0], [0, 0, 1, 0], [], []>} : vector<16x32xf32>, vector<16x32xf32>, vector<16x16xf32> -> vector<16x16xf32>
    %cst_19 = arith.constant dense<0xFF800000> : vector<16xf32>
    %36 = vector.multi_reduction <maximumf>, %35, %cst_19 [0] : vector<16x16xf32> to vector<16xf32>
    %37 = vector.shape_cast %36 : vector<16xf32> to vector<1x16xf32>
    %38 = vector.broadcast %37 : vector<1x16xf32> to vector<16x16xf32>
    %39 = arith.subf %35, %38 : vector<16x16xf32>
    %40 = math.exp %39 : vector<16x16xf32>
    %cst_20 = arith.constant dense<0.000000e+00> : vector<16xf32>
    %41 = vector.multi_reduction <add>, %40, %cst_20 [0] : vector<16x16xf32> to vector<16xf32>
    %42 = vector.shape_cast %41 : vector<16xf32> to vector<1x16xf32>
    %43 = tpu.reciprocal %42 : vector<1x16xf32> -> vector<1x16xf32>
    %44 = vector.broadcast %43 : vector<1x16xf32> to vector<16x16xf32>
    %45 = arith.mulf %40, %44 : vector<16x16xf32>
    %cst_21 = arith.constant dense<0.000000e+00> : vector<16x16xf32>
    %46 = tpu.matmul %45, %10, %cst_21 {dimension_numbers = #tpu.dot_dimension_numbers<[1], [0], [0], [1], [0, 0, 1, 1], [], []>} : vector<16x16xf32>, vector<16x16xf32>, vector<16x16xf32> -> vector<16x16xf32>
    %cst_22 = arith.constant dense<0.000000e+00> : vector<16x32xf32>
    %47 = tpu.matmul %46, %34, %cst_22 {dimension_numbers = #tpu.dot_dimension_numbers<[1], [0], [0], [1], [0, 0, 1, 1], [], []>} : vector<16x16xf32>, vector<16x32xf32>, vector<16x32xf32> -> vector<16x32xf32>
    %cst_23 = arith.constant 0.000000e+00 : f32
    %48 = vector.broadcast %cst_23 : f32 to vector<16x32xf32>
    %49 = arith.maximumf %47, %48 : vector<16x32xf32>
    %c0_24 = arith.constant 0 : index
    %c1 = arith.constant 1 : index
    %c0_25 = arith.constant 0 : index
    %c0_26 = arith.constant 0 : index
    %50 = vector.load %arg5[%c0_24, %c1, %c0_25, %c0_26] : memref<1x2x16x32xf32, #tpu.memory_space<vmem>>, vector<1x1x16x32xf32>
    %51 = vector.shape_cast %50 : vector<1x1x16x32xf32> to vector<16x32xf32>
    %52 = vector.shape_cast %49 : vector<16x32xf32> to vector<1x1x16x32xf32>
    tpu.vector_store %arg5[%c0_24, %c1, %c0_25, %c0_26], %52 {strides = array<i32>} : memref<1x2x16x32xf32, #tpu.memory_space<vmem>>, vector<1x1x16x32xf32>,
    return
  }
  func.func @transform_0(%arg0: i32) -> (i32, i32, i32) {
    %c0_i32 = arith.constant 0 : i32
    %c0_i32_0 = arith.constant 0 : i32
    %c0_i32_1 = arith.constant 0 : i32
    return %arg0, %c0_i32, %c0_i32_0 : i32, i32, i32
  }
  func.func @transform_1(%arg0: i32) -> (i32, i32) {
    %c0_i32 = arith.constant 0 : i32
    %c0_i32_0 = arith.constant 0 : i32
    %c0_i32_1 = arith.constant 0 : i32
    return %c0_i32, %c0_i32_0 : i32, i32
  }
  func.func @transform_2(%arg0: i32) -> (i32, i32) {
    %c0_i32 = arith.constant 0 : i32
    %c0_i32_0 = arith.constant 0 : i32
    %c0_i32_1 = arith.constant 0 : i32
    return %c0_i32, %c0_i32_0 : i32, i32
  }
  func.func @transform_3(%arg0: i32) -> (i32, i32) {
    %c0_i32 = arith.constant 0 : i32
    %c0_i32_0 = arith.constant 0 : i32
    %c0_i32_1 = arith.constant 0 : i32
    return %c0_i32, %c0_i32_0 : i32, i32
  }
  func.func @transform_4(%arg0: i32) -> (i32, i32, i32, i32) {
    %c0_i32 = arith.constant 0 : i32
    %c0_i32_0 = arith.constant 0 : i32
    %c0_i32_1 = arith.constant 0 : i32
    %c0_i32_2 = arith.constant 0 : i32
    return %arg0, %c0_i32, %c0_i32_0, %c0_i32_1 : i32, i32, i32, i32
  }
}

</mosaic_0001>

<llo_original>
// kernel: embgcn_sa_forward.1
$region0: #{embgcn_sa_forward.1}
  #allocation0 [shape = 'u32[]', space=smem, size = 0x4, offset = 0x4, fixed_abs, tag = 'smem constant byte address 0x4 - core index']
  #allocation1 [shape = 'u32[144,128]{1,0:T(1,128)}', space=vmem, size = 0x12000, scoped, tag = 'internal scratch']
  %s0 = inlined_call_operand.vmem [shape: f32[1,32,4], index: 0, kind: input, shape index: {}]
  %s1 = inlined_call_operand.vmem [shape: f32[4,96], index: 1, kind: input, shape index: {}]
  %s2 = inlined_call_operand.vmem [shape: f32[1,96], index: 2, kind: input, shape index: {}]
  %s3 = inlined_call_operand.vmem [shape: f32[16,16], index: 3, kind: input, shape index: {}]
  %s4 = inlined_call_operand.hbm [shape: f32[1,2,16,32], index: 4, kind: output, shape index: {}]
  %s5 = sld [smem:[#allocation0]]
  $region26: #{embgcn_sa_forward.1} parent=0
    _
  %s7 = ssub.s32 1, %s5
  %s8 = scalar_select 0, %s7, %s5
  $region1: #{embgcn_sa_forward.1} parent=0
    #allocation2 [shape = 'u8[16384]{0}', space=vmem, size = 0x4000, scoped, tag = 'output window, operand 0, single buffered']
    #allocation3 [shape = 's32[1]{0}', space=sflag, size = 0x4, scoped, tag = 'scoped memory for embgcn_sa_forward.1']
    %9 = vsyncpa [#allocation3], 0
    // Predicated region
    $region2: #{embgcn_sa_forward.1} parent=1 // pred_check
      _
    $region3: #{embgcn_sa_forward.1} parent=1 // pred_check_branch
      %11 = sbr.rel (0) target = $region5
    $region4: #{embgcn_sa_forward.1} parent=1 // pred_region
      _
    $region5: #{embgcn_sa_forward.1} parent=1 // pred_fallthru
      _
    // Predicated region
    $region6: #{embgcn_sa_forward.1} parent=1 // pred_check
      _
    $region7: #{embgcn_sa_forward.1} parent=1 // pred_check_branch
      %13 = sbr.rel (0) target = $region9
    $region8: #{embgcn_sa_forward.1} parent=1 // pred_region
      _
    $region9: #{embgcn_sa_forward.1} parent=1 // pred_fallthru
      _
    // Predicated region
    $region10: #{embgcn_sa_forward.1} parent=1 // pred_check
      _
    $region11: #{embgcn_sa_forward.1} parent=1 // pred_check_branch
      %15 = sbr.rel (0) target = $region13
    $region12: #{embgcn_sa_forward.1} parent=1 // pred_region
      _
    $region13: #{embgcn_sa_forward.1} parent=1 // pred_fallthru
      _
    // Predicated region
    $region14: #{embgcn_sa_forward.1} parent=1 // pred_check
      _
    $region15: #{embgcn_sa_forward.1} parent=1 // pred_check_branch
      %17 = sbr.rel (0) target = $region17
    $region16: #{embgcn_sa_forward.1} parent=1 // pred_region
      _
    $region17: #{embgcn_sa_forward.1} parent=1 // pred_fallthru
      _
    %v18 = vld [vmem:[%s0] sm:$0xff]
    %v19 = vld [vmem:[%s0 + $0x8] sm:$0xff]
    %v20 = vld [vmem:[%s0 + $0x10] sm:$0xff]
    %v21 = vld [vmem:[%s0 + $0x18] sm:$0xff]
    %v22 = vld [vmem:[%s1] sm:$0xf]
    %v23 = vld [vmem:[%s2] sm:$0x1]
    %v25 = vlaneseq
    %v26 = vshrl.u32 %v25, 7
    %v27 = vsub.s32 0, %v26
    %v28 = vrot.slane %v23, %v27
    %vm30 = vcmask 31744
    %v32 = vsel %vm30, %v18, 0
    %v35 = vsel %vm30, %v19, 0
    %v38 = vsel %vm30, %v20, 0
    %v41 = vsel %vm30, %v21, 0
    %vm43 = vcmask 1043456
    %v45 = vsel %vm43, %v22, 0
    %47 = vmatprep.subr.mxu0 0.0
    %48 = vmatpush1.msra.mxu0 0.0
    %49 = vmatprep.subr.mxu0 0.0
    %50 = vmatpush1.msra.mxu0 0.0
    %51 = vmatprep.subr.mxu0 0.0
    %52 = vmatpush1.msra.mxu0 0.0
    %53 = vmatprep.subr.mxu0 0.0
    %54 = vmatpush1.msra.mxu0 0.0
    %55 = vmatprep.subr.mxu0 0.0
    %56 = vmatpush1.msra.mxu0 0.0
    %57 = vmatprep.subr.mxu0 0.0
    %58 = vmatpush1.msra.mxu0 0.0
    %59 = vmatprep.subr.mxu0 0.0
    %60 = vmatpush1.msra.mxu0 0.0
    %61 = vmatprep.subr.mxu0 0.0
    %62 = vmatpush1.msra.mxu0 0.0
    %63 = vmatprep.subr.mxu0 0.0
    %64 = vmatpush1.msra.mxu0 0.0
    %65 = vmatprep.subr.mxu0 0.0
    %66 = vmatpush1.msra.mxu0 0.0
    %67 = vmatprep.subr.mxu0 0.0
    %68 = vmatpush1.msra.mxu0 0.0
    %69 = vmatprep.subr.mxu0 0.0
    %70 = vmatpush1.msra.mxu0 0.0
    %71 = vmatprep.subr.mxu0 0.0
    %72 = vmatpush1.msra.mxu0 0.0
    %73 = vmatprep.subr.mxu0 0.0
    %74 = vmatpush1.msra.mxu0 0.0
    %75 = vmatprep.subr.mxu0 0.0
    %76 = vmatpush1.msra.mxu0 0.0
    %77 = vmatprep.subr.mxu0 0.0
    %78 = vmatpush1.msra.mxu0 %v45
    %79 = vmatprep.subr.mxu0 0.0
    %80 = vmatpush2.msra.mxu0 0.0
    %81 = vmatprep.subr.mxu0 0.0
    %82 = vmatpush2.msra.mxu0 0.0
    %83 = vmatprep.subr.mxu0 0.0
    %84 = vmatpush2.msra.mxu0 0.0
    %85 = vmatprep.subr.mxu0 0.0
    %86 = vmatpush2.msra.mxu0 0.0
    %87 = vmatprep.subr.mxu0 0.0
    %88 = vmatpush2.msra.mxu0 0.0
    %89 = vmatprep.subr.mxu0 0.0
    %90 = vmatpush2.msra.mxu0 0.0
    %91 = vmatprep.subr.mxu0 0.0
    %92 = vmatpush2.msra.mxu0 0.0
    %93 = vmatprep.subr.mxu0 0.0
    %94 = vmatpush2.msra.mxu0 0.0
    %95 = vmatprep.subr.mxu0 0.0
    %96 = vmatpush2.msra.mxu0 0.0
    %97 = vmatprep.subr.mxu0 0.0
    %98 = vmatpush2.msra.mxu0 0.0
    %99 = vmatprep.subr.mxu0 0.0
    %100 = vmatpush2.msra.mxu0 0.0
    %101 = vmatprep.subr.mxu0 0.0
    %102 = vmatpush2.msra.mxu0 0.0
    %103 = vmatprep.subr.mxu0 0.0
    %104 = vmatpush2.msra.mxu0 0.0
    %105 = vmatprep.subr.mxu0 0.0
    %106 = vmatpush2.msra.mxu0 0.0
    %107 = vmatprep.subr.mxu0 0.0
    %108 = vmatpush2.msra.mxu0 0.0
    %109 = vmatprep.subr.mxu0 0.0
    %110 = vmatpush2.msra.mxu0 0.0
    %111 = vmatprep.mubr.f32.mxu0 0.0
    %112 = vmatmul.mubr.f32.gmra.mxu0 %v32
    %v113 = vpop.f32.mrf.mxu0
    %v114 = vadd.f32 %v28, %v113
    %v115 = vpop.f32.mrf.mxu0
    %116 = vmatprep.mubr.f32.mxu0 0.0
    %117 = vmatmul.mubr.f32.gmra.mxu0 %v35
    %v118 = vpop.f32.mrf.mxu0
    %v119 = vadd.f32 %v28, %v118
    %v120 = vpop.f32.mrf.mxu0
    %121 = vmatprep.mubr.f32.mxu0 0.0
    %122 = vmatmul.mubr.f32.gmra.mxu0 %v38
    %v123 = vpop.f32.mrf.mxu0
    %v124 = vadd.f32 %v28, %v123
    %v125 = vpop.f32.mrf.mxu0
    %126 = vmatprep.mubr.f32.mxu0 0.0
    %127 = vmatmul.mubr.f32.gmra.mxu0 %v41
    %v128 = vpop.f32.mrf.mxu0
    %v129 = vadd.f32 %v28, %v128
    %v130 = vpop.f32.mrf.mxu0
    %131 = vdwg.mxu0
    %v132 = vld [vmem:[%s3] sm:$0xff]
    %v133 = vld [vmem:[%s3 + $0x8] sm:$0xff]
    %136 = vrot.lane.b32.xlu0 %v114, 96
    %v137 = vpop.permute.xlu0 %136
    %138 = vrot.lane.b32.xlu0 %v119, 96
    %v139 = vpop.permute.xlu0 %138
    %vm140 = vcmask 261120
    %v141 = vsel %vm140, %v114, 0
    %v143 = vsel %vm140, %v119, 0
    %v145 = vsel %vm140, %v137, 0
    %v147 = vsel %vm140, %v139, 0
    %149 = vmatprep.subr.mxu0 0.0
    %150 = vmatpush1.xpose.msra.mxu0 0.0
    %151 = vmatprep.subr.mxu0 0.0
    %152 = vmatpush1.xpose.msra.mxu0 0.0
    %153 = vmatprep.subr.mxu0 0.0
    %154 = vmatpush1.xpose.msra.mxu0 0.0
    %155 = vmatprep.subr.mxu0 0.0
    %156 = vmatpush1.xpose.msra.mxu0 0.0
    %157 = vmatprep.subr.mxu0 0.0
    %158 = vmatpush1.xpose.msra.mxu0 0.0
    %159 = vmatprep.subr.mxu0 0.0
    %160 = vmatpush1.xpose.msra.mxu0 0.0
    %161 = vmatprep.subr.mxu0 0.0
    %162 = vmatpush1.xpose.msra.mxu0 0.0
    %163 = vmatprep.subr.mxu0 0.0
    %164 = vmatpush1.xpose.msra.mxu0 0.0
    %165 = vmatprep.subr.mxu0 0.0
    %166 = vmatpush1.xpose.msra.mxu0 0.0
    %167 = vmatprep.subr.mxu0 0.0
    %168 = vmatpush1.xpose.msra.mxu0 0.0
    %169 = vmatprep.subr.mxu0 0.0
    %170 = vmatpush1.xpose.msra.mxu0 0.0
    %171 = vmatprep.subr.mxu0 0.0
    %172 = vmatpush1.xpose.msra.mxu0 0.0
    %173 = vmatprep.subr.mxu0 0.0
    %174 = vmatpush1.xpose.msra.mxu0 0.0
    %175 = vmatprep.subr.mxu0 0.0
    %176 = vmatpush1.xpose.msra.mxu0 0.0
    %177 = vmatprep.subr.mxu0 0.0
    %178 = vmatpush1.xpose.msra.mxu0 %v147
    %179 = vmatprep.subr.mxu0 0.0
    %180 = vmatpush1.xpose.msra.mxu0 %v145
    %181 = vmatprep.subr.mxu0 0.0
    %182 = vmatpush2.xpose.msra.mxu0 0.0
    %183 = vmatprep.subr.mxu0 0.0
    %184 = vmatpush2.xpose.msra.mxu0 0.0
    %185 = vmatprep.subr.mxu0 0.0
    %186 = vmatpush2.xpose.msra.mxu0 0.0
    %187 = vmatprep.subr.mxu0 0.0
    %188 = vmatpush2.xpose.msra.mxu0 0.0
    %189 = vmatprep.subr.mxu0 0.0
    %190 = vmatpush2.xpose.msra.mxu0 0.0
    %191 = vmatprep.subr.mxu0 0.0
    %192 = vmatpush2.xpose.msra.mxu0 0.0
    %193 = vmatprep.subr.mxu0 0.0
    %194 = vmatpush2.xpose.msra.mxu0 0.0
    %195 = vmatprep.subr.mxu0 0.0
    %196 = vmatpush2.xpose.msra.mxu0 0.0
    %197 = vmatprep.subr.mxu0 0.0
    %198 = vmatpush2.xpose.msra.mxu0 0.0
    %199 = vmatprep.subr.mxu0 0.0
    %200 = vmatpush2.xpose.msra.mxu0 0.0
    %201 = vmatprep.subr.mxu0 0.0
    %202 = vmatpush2.xpose.msra.mxu0 0.0
    %203 = vmatprep.subr.mxu0 0.0
    %204 = vmatpush2.xpose.msra.mxu0 0.0
    %205 = vmatprep.subr.mxu0 0.0
    %206 = vmatpush2.xpose.msra.mxu0 0.0
    %207 = vmatprep.subr.mxu0 0.0
    %208 = vmatpush2.xpose.msra.mxu0 0.0
    %209 = vmatprep.subr.mxu0 0.0
    %210 = vmatpush2.xpose.msra.mxu0 0.0
    %211 = vmatprep.subr.mxu0 0.0
    %212 = vmatpush2.xpose.msra.mxu0 0.0
    %213 = vmatprep.mubr.f32.mxu0 0.0
    %214 = vmatmul.mubr.f32.gmra.mxu0 %v141
    %v215 = vpop.f32.mrf.mxu0
    %v216 = vadd.f32 0.0, %v215
    %v217 = vpop.f32.mrf.mxu0
    %218 = vmatprep.mubr.f32.mxu0 0.0
    %219 = vmatmul.mubr.f32.gmra.mxu0 %v143
    %v220 = vpop.f32.mrf.mxu0
    %v221 = vadd.f32 0.0, %v220
    %v222 = vpop.f32.mrf.mxu0
    %223 = vdwg.mxu0
    %vm224 = vcmask 130048
    %v225 = vsel %vm224, %v216, -inf
    %v226 = vsel %vm224, %v221, -inf
    %v227 = vmax.f32 %v225, %v226
    %v228 = vrot.slane %v227, 4
    %v229 = vmax.f32 %v227, %v228
    %v230 = vrot.slane %v229, 2
    %v231 = vmax.f32 %v229, %v230
    %v232 = vrot.slane %v231, 1
    %v233 = vmax.f32 %v231, %v232
    %v234 = vsub.f32 %v216, %v233
    %v235 = vsub.f32 %v221, %v233
    %v236 = vmul.f32 %v234, 1.442695
    %v237 = vpow.pop %v236
    %v238 = vmul.f32 %v235, 1.442695
    %v239 = vpow.pop %v238
    %v240 = vsel %vm224, %v237, 0.0
    %v241 = vsel %vm224, %v239, 0.0
    %v242 = vadd.f32 %v240, %v241
    %v243 = vrot.slane %v242, 4
    %v244 = vadd.f32 %v242, %v243
    %v245 = vrot.slane %v244, 2
    %v246 = vadd.f32 %v244, %v245
    %v247 = vrot.slane %v246, 1
    %v248 = vadd.f32 %v246, %v247
    %v249 = vrcp.pop %v248
    %v250 = vmul.f32 %v237, %v249
    %v251 = vmul.f32 %v239, %v249
    %v253 = vsel %vm224, %v250, 0
    %v256 = vsel %vm224, %v251, 0
    %258 = vmatprep.subr.mxu0 0.0
    %259 = vmatpush1.msra.mxu0 0.0
    %260 = vmatprep.subr.mxu0 0.0
    %261 = vmatpush1.msra.mxu0 0.0
    %262 = vmatprep.subr.mxu0 0.0
    %263 = vmatpush1.msra.mxu0 0.0
    %264 = vmatprep.subr.mxu0 0.0
    %265 = vmatpush1.msra.mxu0 0.0
    %266 = vmatprep.subr.mxu0 0.0
    %267 = vmatpush1.msra.mxu0 0.0
    %268 = vmatprep.subr.mxu0 0.0
    %269 = vmatpush1.msra.mxu0 0.0
    %270 = vmatprep.subr.mxu0 0.0
    %271 = vmatpush1.msra.mxu0 0.0
    %272 = vmatprep.subr.mxu0 0.0
    %273 = vmatpush1.msra.mxu0 0.0
    %274 = vmatprep.subr.mxu0 0.0
    %275 = vmatpush1.msra.mxu0 0.0
    %276 = vmatprep.subr.mxu0 0.0
    %277 = vmatpush1.msra.mxu0 0.0
    %278 = vmatprep.subr.mxu0 0.0
    %279 = vmatpush1.msra.mxu0 0.0
    %280 = vmatprep.subr.mxu0 0.0
    %281 = vmatpush1.msra.mxu0 0.0
    %282 = vmatprep.subr.mxu0 0.0
    %283 = vmatpush1.msra.mxu0 0.0
    %284 = vmatprep.subr.mxu0 0.0
    %285 = vmatpush1.msra.mxu0 0.0
    %286 = vmatprep.subr.mxu0 0.0
    %287 = vmatpush1.msra.mxu0 %v133
    %288 = vmatprep.subr.mxu0 0.0
    %289 = vmatpush1.msra.mxu0 %v132
    %290 = vmatprep.subr.mxu0 0.0
    %291 = vmatpush2.msra.mxu0 0.0
    %292 = vmatprep.subr.mxu0 0.0
    %293 = vmatpush2.msra.mxu0 0.0
    %294 = vmatprep.subr.mxu0 0.0
    %295 = vmatpush2.msra.mxu0 0.0
    %296 = vmatprep.subr.mxu0 0.0
    %297 = vmatpush2.msra.mxu0 0.0
    %298 = vmatprep.subr.mxu0 0.0
    %299 = vmatpush2.msra.mxu0 0.0
    %300 = vmatprep.subr.mxu0 0.0
    %301 = vmatpush2.msra.mxu0 0.0
    %302 = vmatprep.subr.mxu0 0.0
    %303 = vmatpush2.msra.mxu0 0.0
    %304 = vmatprep.subr.mxu0 0.0
    %305 = vmatpush2.msra.mxu0 0.0
    %306 = vmatprep.subr.mxu0 0.0
    %307 = vmatpush2.msra.mxu0 0.0
    %308 = vmatprep.subr.mxu0 0.0
    %309 = vmatpush2.msra.mxu0 0.0
    %310 = vmatprep.subr.mxu0 0.0
    %311 = vmatpush2.msra.mxu0 0.0
    %312 = vmatprep.subr.mxu0 0.0
    %313 = vmatpush2.msra.mxu0 0.0
    %314 = vmatprep.subr.mxu0 0.0
    %315 = vmatpush2.msra.mxu0 0.0
    %316 = vmatprep.subr.mxu0 0.0
    %317 = vmatpush2.msra.mxu0 0.0
    %318 = vmatprep.subr.mxu0 0.0
    %319 = vmatpush2.msra.mxu0 0.0
    %320 = vmatprep.subr.mxu0 0.0
    %321 = vmatpush2.msra.mxu0 0.0
    %322 = vmatprep.mubr.f32.mxu0 0.0
    %323 = vmatmul.mubr.f32.gmra.mxu0 %v253
    %v324 = vpop.f32.mrf.mxu0
    %v325 = vadd.f32 0.0, %v324
    %v326 = vpop.f32.mrf.mxu0
    %327 = vmatprep.mubr.f32.mxu0 0.0
    %328 = vmatmul.mubr.f32.gmra.mxu0 %v256
    %v329 = vpop.f32.mrf.mxu0
    %v330 = vadd.f32 0.0, %v329
    %v331 = vpop.f32.mrf.mxu0
    %332 = vdwg.mxu0
    %333 = vrot.lane.b32.xlu0 %v114, 64
    %v334 = vpop.permute.xlu0 %333
    %335 = vrot.lane.b32.xlu0 %v119, 64
    %v336 = vpop.permute.xlu0 %335
    %v340 = vsel %vm224, %v325, 0
    %v343 = vsel %vm224, %v330, 0
    %345 = vmatprep.subr.mxu0 0.0
    %346 = vmatpush1.msra.mxu0 0.0
    %347 = vmatprep.subr.mxu0 0.0
    %348 = vmatpush1.msra.mxu0 0.0
    %349 = vmatprep.subr.mxu0 0.0
    %350 = vmatpush1.msra.mxu0 0.0
    %351 = vmatprep.subr.mxu0 0.0
    %352 = vmatpush1.msra.mxu0 0.0
    %353 = vmatprep.subr.mxu0 0.0
    %354 = vmatpush1.msra.mxu0 0.0
    %355 = vmatprep.subr.mxu0 0.0
    %356 = vmatpush1.msra.mxu0 0.0
    %357 = vmatprep.subr.mxu0 0.0
    %358 = vmatpush1.msra.mxu0 0.0
    %359 = vmatprep.subr.mxu0 0.0
    %360 = vmatpush1.msra.mxu0 0.0
    %361 = vmatprep.subr.mxu0 0.0
    %362 = vmatpush1.msra.mxu0 0.0
    %363 = vmatprep.subr.mxu0 0.0
    %364 = vmatpush1.msra.mxu0 0.0
    %365 = vmatprep.subr.mxu0 0.0
    %366 = vmatpush1.msra.mxu0 0.0
    %367 = vmatprep.subr.mxu0 0.0
    %368 = vmatpush1.msra.mxu0 0.0
    %369 = vmatprep.subr.mxu0 0.0
    %370 = vmatpush1.msra.mxu0 0.0
    %371 = vmatprep.subr.mxu0 0.0
    %372 = vmatpush1.msra.mxu0 0.0
    %373 = vmatprep.subr.mxu0 0.0
    %374 = vmatpush1.msra.mxu0 %v336
    %375 = vmatprep.subr.mxu0 0.0
    %376 = vmatpush1.msra.mxu0 %v334
    %377 = vmatprep.subr.mxu0 0.0
    %378 = vmatpush2.msra.mxu0 0.0
    %379 = vmatprep.subr.mxu0 0.0
    %380 = vmatpush2.msra.mxu0 0.0
    %381 = vmatprep.subr.mxu0 0.0
    %382 = vmatpush2.msra.mxu0 0.0
    %383 = vmatprep.subr.mxu0 0.0
    %384 = vmatpush2.msra.mxu0 0.0
    %385 = vmatprep.subr.mxu0 0.0
    %386 = vmatpush2.msra.mxu0 0.0
    %387 = vmatprep.subr.mxu0 0.0
    %388 = vmatpush2.msra.mxu0 0.0
    %389 = vmatprep.subr.mxu0 0.0
    %390 = vmatpush2.msra.mxu0 0.0
    %391 = vmatprep.subr.mxu0 0.0
    %392 = vmatpush2.msra.mxu0 0.0
    %393 = vmatprep.subr.mxu0 0.0
    %394 = vmatpush2.msra.mxu0 0.0
    %395 = vmatprep.subr.mxu0 0.0
    %396 = vmatpush2.msra.mxu0 0.0
    %397 = vmatprep.subr.mxu0 0.0
    %398 = vmatpush2.msra.mxu0 0.0
    %399 = vmatprep.subr.mxu0 0.0
    %400 = vmatpush2.msra.mxu0 0.0
    %401 = vmatprep.subr.mxu0 0.0
    %402 = vmatpush2.msra.mxu0 0.0
    %403 = vmatprep.subr.mxu0 0.0
    %404 = vmatpush2.msra.mxu0 0.0
    %405 = vmatprep.subr.mxu0 0.0
    %406 = vmatpush2.msra.mxu0 0.0
    %407 = vmatprep.subr.mxu0 0.0
    %408 = vmatpush2.msra.mxu0 0.0
    %409 = vmatprep.mubr.f32.mxu0 0.0
    %410 = vmatmul.mubr.f32.gmra.mxu0 %v340
    %v411 = vpop.f32.mrf.mxu0
    %v412 = vadd.f32 0.0, %v411
    %v413 = vpop.f32.mrf.mxu0
    %414 = vmatprep.mubr.f32.mxu0 0.0
    %415 = vmatmul.mubr.f32.gmra.mxu0 %v343
    %v416 = vpop.f32.mrf.mxu0
    %v417 = vadd.f32 0.0, %v416
    %v418 = vpop.f32.mrf.mxu0
    %419 = vdwg.mxu0
    %v420 = vmax.f32 %v412, 0.0
    %v421 = vmax.f32 %v417, 0.0
    %422 = vst.msk [vmem:[#allocation2] sm:$0xff] %vm140, %v420
    %423 = vst.msk [vmem:[#allocation2 + $0x8] sm:$0xff] %vm140, %v421
    %426 = vrot.lane.b32.xlu0 %v124, 96
    %v427 = vpop.permute.xlu0 %426
    %428 = vrot.lane.b32.xlu0 %v129, 96
    %v429 = vpop.permute.xlu0 %428
    %v430 = vsel %vm140, %v124, 0
    %v432 = vsel %vm140, %v129, 0
    %v434 = vsel %vm140, %v427, 0
    %v436 = vsel %vm140, %v429, 0
    %438 = vmatprep.subr.mxu0 0.0
    %439 = vmatpush1.xpose.msra.mxu0 0.0
    %440 = vmatprep.subr.mxu0 0.0
    %441 = vmatpush1.xpose.msra.mxu0 0.0
    %442 = vmatprep.subr.mxu0 0.0
    %443 = vmatpush1.xpose.msra.mxu0 0.0
    %444 = vmatprep.subr.mxu0 0.0
    %445 = vmatpush1.xpose.msra.mxu0 0.0
    %446 = vmatprep.subr.mxu0 0.0
    %447 = vmatpush1.xpose.msra.mxu0 0.0
    %448 = vmatprep.subr.mxu0 0.0
    %449 = vmatpush1.xpose.msra.mxu0 0.0
    %450 = vmatprep.subr.mxu0 0.0
    %451 = vmatpush1.xpose.msra.mxu0 0.0
    %452 = vmatprep.subr.mxu0 0.0
    %453 = vmatpush1.xpose.msra.mxu0 0.0
    %454 = vmatprep.subr.mxu0 0.0
    %455 = vmatpush1.xpose.msra.mxu0 0.0
    %456 = vmatprep.subr.mxu0 0.0
    %457 = vmatpush1.xpose.msra.mxu0 0.0
    %458 = vmatprep.subr.mxu0 0.0
    %459 = vmatpush1.xpose.msra.mxu0 0.0
    %460 = vmatprep.subr.mxu0 0.0
    %461 = vmatpush1.xpose.msra.mxu0 0.0
    %462 = vmatprep.subr.mxu0 0.0
    %463 = vmatpush1.xpose.msra.mxu0 0.0
    %464 = vmatprep.subr.mxu0 0.0
    %465 = vmatpush1.xpose.msra.mxu0 0.0
    %466 = vmatprep.subr.mxu0 0.0
    %467 = vmatpush1.xpose.msra.mxu0 %v436
    %468 = vmatprep.subr.mxu0 0.0
    %469 = vmatpush1.xpose.msra.mxu0 %v434
    %470 = vmatprep.subr.mxu0 0.0
    %471 = vmatpush2.xpose.msra.mxu0 0.0
    %472 = vmatprep.subr.mxu0 0.0
    %473 = vmatpush2.xpose.msra.mxu0 0.0
    %474 = vmatprep.subr.mxu0 0.0
    %475 = vmatpush2.xpose.msra.mxu0 0.0
    %476 = vmatprep.subr.mxu0 0.0
    %477 = vmatpush2.xpose.msra.mxu0 0.0
    %478 = vmatprep.subr.mxu0 0.0
    %479 = vmatpush2.xpose.msra.mxu0 0.0
    %480 = vmatprep.subr.mxu0 0.0
    %481 = vmatpush2.xpose.msra.mxu0 0.0
    %482 = vmatprep.subr.mxu0 0.0
    %483 = vmatpush2.xpose.msra.mxu0 0.0
    %484 = vmatprep.subr.mxu0 0.0
    %485 = vmatpush2.xpose.msra.mxu0 0.0
    %486 = vmatprep.subr.mxu0 0.0
    %487 = vmatpush2.xpose.msra.mxu0 0.0
    %488 = vmatprep.subr.mxu0 0.0
    %489 = vmatpush2.xpose.msra.mxu0 0.0
    %490 = vmatprep.subr.mxu0 0.0
    %491 = vmatpush2.xpose.msra.mxu0 0.0
    %492 = vmatprep.subr.mxu0 0.0
    %493 = vmatpush2.xpose.msra.mxu0 0.0
    %494 = vmatprep.subr.mxu0 0.0
    %495 = vmatpush2.xpose.msra.mxu0 0.0
    %496 = vmatprep.subr.mxu0 0.0
    %497 = vmatpush2.xpose.msra.mxu0 0.0
    %498 = vmatprep.subr.mxu0 0.0
    %499 = vmatpush2.xpose.msra.mxu0 0.0
    %500 = vmatprep.subr.mxu0 0.0
    %501 = vmatpush2.xpose.msra.mxu0 0.0
    %502 = vmatprep.mubr.f32.mxu0 0.0
    %503 = vmatmul.mubr.f32.gmra.mxu0 %v430
    %v504 = vpop.f32.mrf.mxu0
    %v505 = vadd.f32 0.0, %v504
    %v506 = vpop.f32.mrf.mxu0
    %507 = vmatprep.mubr.f32.mxu0 0.0
    %508 = vmatmul.mubr.f32.gmra.mxu0 %v432
    %v509 = vpop.f32.mrf.mxu0
    %v510 = vadd.f32 0.0, %v509
    %v511 = vpop.f32.mrf.mxu0
    %512 = vdwg.mxu0
    %v513 = vsel %vm224, %v505, -inf
    %v514 = vsel %vm224, %v510, -inf
    %v515 = vmax.f32 %v513, %v514
    %v516 = vrot.slane %v515, 4
    %v517 = vmax.f32 %v515, %v516
    %v518 = vrot.slane %v517, 2
    %v519 = vmax.f32 %v517, %v518
    %v520 = vrot.slane %v519, 1
    %v521 = vmax.f32 %v519, %v520
    %v522 = vsub.f32 %v505, %v521
    %v523 = vsub.f32 %v510, %v521
    %v524 = vmul.f32 %v522, 1.442695
    %v525 = vpow.pop %v524
    %v526 = vmul.f32 %v523, 1.442695
    %v527 = vpow.pop %v526
    %v528 = vsel %vm224, %v525, 0.0
    %v529 = vsel %vm224, %v527, 0.0
    %v530 = vadd.f32 %v528, %v529
    %v531 = vrot.slane %v530, 4
    %v532 = vadd.f32 %v530, %v531
    %v533 = vrot.slane %v532, 2
    %v534 = vadd.f32 %v532, %v533
    %v535 = vrot.slane %v534, 1
    %v536 = vadd.f32 %v534, %v535
    %v537 = vrcp.pop %v536
    %v538 = vmul.f32 %v525, %v537
    %v539 = vmul.f32 %v527, %v537
    %v541 = vsel %vm224, %v538, 0
    %v544 = vsel %vm224, %v539, 0
    %546 = vmatprep.subr.mxu0 0.0
    %547 = vmatpush1.msra.mxu0 0.0
    %548 = vmatprep.subr.mxu0 0.0
    %549 = vmatpush1.msra.mxu0 0.0
    %550 = vmatprep.subr.mxu0 0.0
    %551 = vmatpush1.msra.mxu0 0.0
    %552 = vmatprep.subr.mxu0 0.0
    %553 = vmatpush1.msra.mxu0 0.0
    %554 = vmatprep.subr.mxu0 0.0
    %555 = vmatpush1.msra.mxu0 0.0
    %556 = vmatprep.subr.mxu0 0.0
    %557 = vmatpush1.msra.mxu0 0.0
    %558 = vmatprep.subr.mxu0 0.0
    %559 = vmatpush1.msra.mxu0 0.0
    %560 = vmatprep.subr.mxu0 0.0
    %561 = vmatpush1.msra.mxu0 0.0
    %562 = vmatprep.subr.mxu0 0.0
    %563 = vmatpush1.msra.mxu0 0.0
    %564 = vmatprep.subr.mxu0 0.0
    %565 = vmatpush1.msra.mxu0 0.0
    %566 = vmatprep.subr.mxu0 0.0
    %567 = vmatpush1.msra.mxu0 0.0
    %568 = vmatprep.subr.mxu0 0.0
    %569 = vmatpush1.msra.mxu0 0.0
    %570 = vmatprep.subr.mxu0 0.0
    %571 = vmatpush1.msra.mxu0 0.0
    %572 = vmatprep.subr.mxu0 0.0
    %573 = vmatpush1.msra.mxu0 0.0
    %574 = vmatprep.subr.mxu0 0.0
    %575 = vmatpush1.msra.mxu0 %v133
    %576 = vmatprep.subr.mxu0 0.0
    %577 = vmatpush1.msra.mxu0 %v132
    %578 = vmatprep.subr.mxu0 0.0
    %579 = vmatpush2.msra.mxu0 0.0
    %580 = vmatprep.subr.mxu0 0.0
    %581 = vmatpush2.msra.mxu0 0.0
    %582 = vmatprep.subr.mxu0 0.0
    %583 = vmatpush2.msra.mxu0 0.0
    %584 = vmatprep.subr.mxu0 0.0
    %585 = vmatpush2.msra.mxu0 0.0
    %586 = vmatprep.subr.mxu0 0.0
    %587 = vmatpush2.msra.mxu0 0.0
    %588 = vmatprep.subr.mxu0 0.0
    %589 = vmatpush2.msra.mxu0 0.0
    %590 = vmatprep.subr.mxu0 0.0
    %591 = vmatpush2.msra.mxu0 0.0
    %592 = vmatprep.subr.mxu0 0.0
    %593 = vmatpush2.msra.mxu0 0.0
    %594 = vmatprep.subr.mxu0 0.0
    %595 = vmatpush2.msra.mxu0 0.0
    %596 = vmatprep.subr.mxu0 0.0
    %597 = vmatpush2.msra.mxu0 0.0
    %598 = vmatprep.subr.mxu0 0.0
    %599 = vmatpush2.msra.mxu0 0.0
    %600 = vmatprep.subr.mxu0 0.0
    %601 = vmatpush2.msra.mxu0 0.0
    %602 = vmatprep.subr.mxu0 0.0
    %603 = vmatpush2.msra.mxu0 0.0
    %604 = vmatprep.subr.mxu0 0.0
    %605 = vmatpush2.msra.mxu0 0.0
    %606 = vmatprep.subr.mxu0 0.0
    %607 = vmatpush2.msra.mxu0 0.0
    %608 = vmatprep.subr.mxu0 0.0
    %609 = vmatpush2.msra.mxu0 0.0
    %610 = vmatprep.mubr.f32.mxu0 0.0
    %611 = vmatmul.mubr.f32.gmra.mxu0 %v541
    %v612 = vpop.f32.mrf.mxu0
    %v613 = vadd.f32 0.0, %v612
    %v614 = vpop.f32.mrf.mxu0
    %615 = vmatprep.mubr.f32.mxu0 0.0
    %616 = vmatmul.mubr.f32.gmra.mxu0 %v544
    %v617 = vpop.f32.mrf.mxu0
    %v618 = vadd.f32 0.0, %v617
    %v619 = vpop.f32.mrf.mxu0
    %620 = vdwg.mxu0
    %621 = vrot.lane.b32.xlu0 %v124, 64
    %v622 = vpop.permute.xlu0 %621
    %623 = vrot.lane.b32.xlu0 %v129, 64
    %v624 = vpop.permute.xlu0 %623
    %v628 = vsel %vm224, %v613, 0
    %v631 = vsel %vm224, %v618, 0
    %633 = vmatprep.subr.mxu0 0.0
    %634 = vmatpush1.msra.mxu0 0.0
    %635 = vmatprep.subr.mxu0 0.0
    %636 = vmatpush1.msra.mxu0 0.0
    %637 = vmatprep.subr.mxu0 0.0
    %638 = vmatpush1.msra.mxu0 0.0
    %639 = vmatprep.subr.mxu0 0.0
    %640 = vmatpush1.msra.mxu0 0.0
    %641 = vmatprep.subr.mxu0 0.0
    %642 = vmatpush1.msra.mxu0 0.0
    %643 = vmatprep.subr.mxu0 0.0
    %644 = vmatpush1.msra.mxu0 0.0
    %645 = vmatprep.subr.mxu0 0.0
    %646 = vmatpush1.msra.mxu0 0.0
    %647 = vmatprep.subr.mxu0 0.0
    %648 = vmatpush1.msra.mxu0 0.0
    %649 = vmatprep.subr.mxu0 0.0
    %650 = vmatpush1.msra.mxu0 0.0
    %651 = vmatprep.subr.mxu0 0.0
    %652 = vmatpush1.msra.mxu0 0.0
    %653 = vmatprep.subr.mxu0 0.0
    %654 = vmatpush1.msra.mxu0 0.0
    %655 = vmatprep.subr.mxu0 0.0
    %656 = vmatpush1.msra.mxu0 0.0
    %657 = vmatprep.subr.mxu0 0.0
    %658 = vmatpush1.msra.mxu0 0.0
    %659 = vmatprep.subr.mxu0 0.0
    %660 = vmatpush1.msra.mxu0 0.0
    %661 = vmatprep.subr.mxu0 0.0
    %662 = vmatpush1.msra.mxu0 %v624
    %663 = vmatprep.subr.mxu0 0.0
    %664 = vmatpush1.msra.mxu0 %v622
    %665 = vmatprep.subr.mxu0 0.0
    %666 = vmatpush2.msra.mxu0 0.0
    %667 = vmatprep.subr.mxu0 0.0
    %668 = vmatpush2.msra.mxu0 0.0
    %669 = vmatprep.subr.mxu0 0.0
    %670 = vmatpush2.msra.mxu0 0.0
    %671 = vmatprep.subr.mxu0 0.0
    %672 = vmatpush2.msra.mxu0 0.0
    %673 = vmatprep.subr.mxu0 0.0
    %674 = vmatpush2.msra.mxu0 0.0
    %675 = vmatprep.subr.mxu0 0.0
    %676 = vmatpush2.msra.mxu0 0.0
    %677 = vmatprep.subr.mxu0 0.0
    %678 = vmatpush2.msra.mxu0 0.0
    %679 = vmatprep.subr.mxu0 0.0
    %680 = vmatpush2.msra.mxu0 0.0
    %681 = vmatprep.subr.mxu0 0.0
    %682 = vmatpush2.msra.mxu0 0.0
    %683 = vmatprep.subr.mxu0 0.0
    %684 = vmatpush2.msra.mxu0 0.0
    %685 = vmatprep.subr.mxu0 0.0
    %686 = vmatpush2.msra.mxu0 0.0
    %687 = vmatprep.subr.mxu0 0.0
    %688 = vmatpush2.msra.mxu0 0.0
    %689 = vmatprep.subr.mxu0 0.0
    %690 = vmatpush2.msra.mxu0 0.0
    %691 = vmatprep.subr.mxu0 0.0
    %692 = vmatpush2.msra.mxu0 0.0
    %693 = vmatprep.subr.mxu0 0.0
    %694 = vmatpush2.msra.mxu0 0.0
    %695 = vmatprep.subr.mxu0 0.0
    %696 = vmatpush2.msra.mxu0 0.0
    %697 = vmatprep.mubr.f32.mxu0 0.0
    %698 = vmatmul.mubr.f32.gmra.mxu0 %v628
    %v699 = vpop.f32.mrf.mxu0
    %v700 = vadd.f32 0.0, %v699
    %v701 = vpop.f32.mrf.mxu0
    %702 = vmatprep.mubr.f32.mxu0 0.0
    %703 = vmatmul.mubr.f32.gmra.mxu0 %v631
    %v704 = vpop.f32.mrf.mxu0
    %v705 = vadd.f32 0.0, %v704
    %v706 = vpop.f32.mrf.mxu0
    %707 = vdwg.mxu0
    %v708 = vmax.f32 %v700, 0.0
    %v709 = vmax.f32 %v705, 0.0
    %s710 = scalar_lea.vmem [#allocation2], 16
    %711 = vst.msk [vmem:[%s710] sm:$0xff] %vm140, %v708
    %712 = vst.msk [vmem:[%s710 + $0x8] sm:$0xff] %vm140, %v709
    // Predicated region
    $region18: #{embgcn_sa_forward.1} parent=1 // pred_check
      _
    $region19: #{embgcn_sa_forward.1} parent=1 // pred_check_branch
      %714 = sbr.rel (0) target = $region21
    $region20: #{embgcn_sa_forward.1} parent=1 // pred_region
      %s716 = ssub.s32 512, 512
      %717 = vsyncadd [#allocation3], %s716
      %s718 = sshll.u32 [#allocation2], 4
      %s719 = int_to_ptr.vmem [resolvable:$true] %s718
      %724 = dma.vmem_to_hbm [thread:$0]  %s719, 512, %s4, [#allocation3], 128, 128, 8
    $region21: #{embgcn_sa_forward.1} parent=1 // pred_fallthru
      _
    // Predicated region
    $region22: #{embgcn_sa_forward.1} parent=1 // pred_check
      _
    $region23: #{embgcn_sa_forward.1} parent=1 // pred_check_branch
      %726 = sbr.rel (0) target = $region25
    $region24: #{embgcn_sa_forward.1} parent=1 // pred_region
      %727 = dma.done [#allocation3], 512
    $region25: #{embgcn_sa_forward.1} parent=1 // pred_fallthru
      _
    %728 = vsyncpa [#allocation3], 1

</llo_original>
